<compile_context>
chip_gen: v6e
topology: v6e:2x2x1
jax: 0.10.0
libtpu: 0.0.40
codegen_flags: <defaults>
</compile_context>

<pallas_src>
import jax
import jax.numpy as jnp
import numpy as np
from jax.experimental import pallas as pl
from jax.experimental.pallas import tpu as pltpu


def _spectral_mix_kernel(x_ref, w_ref, o_ref):
    """out[b,o,m] = sum_i x[b,i,m] * w[i,o,m]   (complex, split into re/im).

    Shapes inside the kernel (one mode tile, TM = lane-dense mode tile):
        x_ref : (2, B, Cin, TM)     [0]=real, [1]=imag
        w_ref : (2, Cin, Cout, TM)
        o_ref : (2, B, Cout, TM)

    Complex product per input channel:
        out_r += xr*wr - xi*wi
        out_i += xr*wi + xi*wr
    Contraction over Cin is a static unrolled VPU broadcast multiply-add
    (Cin, Cout << 128, so the MXU path would run nearly empty).
    """
    x = x_ref[...]                          # (2, B, Cin, TM)
    w = w_ref[...]                          # (2, Cin, Cout, TM)
    xr, xi = x[0], x[1]                     # (B, Cin, TM)
    wr, wi = w[0], w[1]                     # (Cin, Cout, TM)

    _, cin, _ = xr.shape

    def term(i):
        xr_i = xr[:, i:i + 1, :]            # (B, 1, TM)
        xi_i = xi[:, i:i + 1, :]
        wr_i = wr[i][None, :, :]            # (1, Cout, TM)
        wi_i = wi[i][None, :, :]
        return (xr_i * wr_i - xi_i * wi_i,  # (B, Cout, TM)
                xr_i * wi_i + xi_i * wr_i)

    out_r, out_i = term(0)
    for i in range(1, cin):                 # static unroll, Cin is tiny
        tr, ti = term(i)
        out_r = out_r + tr
        out_i = out_i + ti

    o_ref[0] = out_r
    o_ref[1] = out_i


def spectral_mix(x_ri, w_ri, *, tile_m):
    """Complex per-mode channel mixing.  Modes lane-dense, gridded over modes.

    x_ri : (2, B, Cin, Mp)  float32, Mp a multiple of tile_m
    w_ri : (2, Cin, Cout, Mp) float32
    returns (2, B, Cout, Mp) float32  ([0]=real, [1]=imag)
    """
    _, B, Cin, Mp = x_ri.shape
    Cout = w_ri.shape[2]
    assert Mp % tile_m == 0

    x_spec = pl.BlockSpec((2, B, Cin, tile_m), lambda m: (0, 0, 0, m))
    w_spec = pl.BlockSpec((2, Cin, Cout, tile_m), lambda m: (0, 0, 0, m))
    o_spec = pl.BlockSpec((2, B, Cout, tile_m), lambda m: (0, 0, 0, m))

    return pl.pallas_call(
        _spectral_mix_kernel,
        out_shape=jax.ShapeDtypeStruct((2, B, Cout, Mp), jnp.float32),
        grid=(Mp // tile_m,),
        in_specs=[x_spec, w_spec],
        out_specs=o_spec,
        compiler_params=pltpu.CompilerParams(
            dimension_semantics=("parallel",)),
    )(x_ri, w_ri)


def _round_up(x, m):
    return ((x + m - 1) // m) * m


def _pick_tile(mp):
    """Largest lane-dense tile (<= 512) that divides the padded mode count."""
    for t in (512, 256, 128):
        if mp % t == 0:
            return t
    return mp


class SpectralConv1dPallas:
    """JAX/Pallas port of the PyTorch SpectralConv1d module."""

    def __init__(self, in_channels, out_channels, modes1, key):
        self.in_channels = in_channels
        self.out_channels = out_channels
        self.modes1 = modes1
        self.modes_padded = _round_up(modes1, 128)
        self.tile_m = _pick_tile(self.modes_padded)

        scale = 1.0 / (in_channels * out_channels)
        kr, ki = jax.random.split(key)
        # torch.rand(..., dtype=torch.cfloat) draws real & imag parts ~ U[0,1).
        self.w_real = scale * jax.random.uniform(
            kr, (in_channels, out_channels, modes1), dtype=jnp.float32)
        self.w_imag = scale * jax.random.uniform(
            ki, (in_channels, out_channels, modes1), dtype=jnp.float32)

        # Kernel-ready weights: same (Cin, Cout, M) layout as PyTorch, real and
        # imag packed along a leading axis, modes padded to a lane-dense
        # multiple of 128.  Done once here (static), not per forward pass.
        pad = ((0, 0), (0, 0), (0, 0), (0, self.modes_padded - modes1))
        self._w_ri = jnp.pad(jnp.stack([self.w_real, self.w_imag]), pad)

    def __call__(self, x):
        # x: (B, C_in, N) float32 (PyTorch NCW layout); assumes modes1 <= N//2+1.
        B, Cin, N = x.shape
        M = self.modes1
        n_freq = N // 2 + 1

        x_ft = jnp.fft.rfft(x, axis=-1)               # (B, Cin, n_freq) complex64
        x_m = x_ft[:, :, :M]                          # keep low modes

        pad = ((0, 0), (0, 0), (0, 0), (0, self.modes_padded - M))
        x_ri = jnp.pad(
            jnp.stack([jnp.real(x_m), jnp.imag(x_m)]).astype(jnp.float32),
            pad)                                       # (2, B, Cin, Mp)

        out_ri = spectral_mix(x_ri, self._w_ri, tile_m=self.tile_m)  # (2,B,Cout,Mp)

        out_m = jax.lax.complex(out_ri[0, :, :, :M],
                                out_ri[1, :, :, :M])   # (B, Cout, M) complex64
        # Zero-fill the high modes via pad (no full zero buffer + update-slice).
        out_ft = jnp.pad(out_m, ((0, 0), (0, 0), (0, n_freq - M)))
        return jnp.fft.irfft(out_ft, n=N, axis=-1)     # (B, Cout, N)


def _reference_forward(x, w_real, w_imag, out_channels, modes1):
    """Pure-JAX reference matching the PyTorch forward exactly."""
    B, Cin, N = x.shape
    x_ft = jnp.fft.rfft(x, axis=-1)
    w = (w_real + 1j * w_imag).astype(jnp.complex64)
    mixed = jnp.einsum('bix,iox->box', x_ft[:, :, :modes1], w)
    out_ft = jnp.zeros((B, out_channels, N // 2 + 1), dtype=jnp.complex64)
    out_ft = out_ft.at[:, :, :modes1].set(mixed)
    return jnp.fft.irfft(out_ft, n=N, axis=-1)


if __name__ == "__main__":
    key = jax.random.PRNGKey(0)
    k_w, k_x = jax.random.split(key)

    B, C_in, C_out, N, modes1 = 2, 4, 4, 16, 5

    module = SpectralConv1dPallas(C_in, C_out, modes1, k_w)
    x = jax.random.normal(k_x, (B, C_in, N), dtype=jnp.float32)

    y = module(x)
    y = jax.block_until_ready(y)

    y_ref = _reference_forward(x, module.w_real, module.w_imag, C_out, modes1)
    y_ref = jax.block_until_ready(y_ref)

    assert y.shape == (B, C_out, N), y.shape
    np.testing.assert_allclose(np.asarray(y), np.asarray(y_ref), rtol=1e-4, atol=1e-5)

    print("KERNEL_OK")
</pallas_src>

<mosaic_0001>
module attributes {stable_mosaic.version = 11 : i64} {
  func.func @_spectral_mix_kernel(%arg0: i32, %arg1: memref<2x2x4x128xf32, #tpu.memory_space<vmem>>, %arg2: memref<2x4x4x128xf32, #tpu.memory_space<vmem>>, %arg3: memref<2x2x4x128xf32, #tpu.memory_space<vmem>>) attributes {dimension_semantics = [#tpu.dimension_semantics<parallel>], iteration_bounds = array<i64: 1>, scalar_prefetch = 0 : i64, scratch_operands = 0 : i64, tpu.core_type = #tpu.core_type<tc>, window_params = [{transform_indices = @transform_0, window_bounds = array<i64: 2, 2, 4, 128>}, {transform_indices = @transform_1, window_bounds = array<i64: 2, 4, 4, 128>}, {transform_indices = @transform_2, window_bounds = array<i64: 2, 2, 4, 128>}]} {
    %c0 = arith.constant 0 : index
    %c0_0 = arith.constant 0 : index
    %c0_1 = arith.constant 0 : index
    %c0_2 = arith.constant 0 : index
    %0 = vector.load %arg1[%c0, %c0_0, %c0_1, %c0_2] : memref<2x2x4x128xf32, #tpu.memory_space<vmem>>, vector<2x2x4x128xf32>
    %c0_3 = arith.constant 0 : index
    %c0_4 = arith.constant 0 : index
    %c0_5 = arith.constant 0 : index
    %c0_6 = arith.constant 0 : index
    %1 = vector.load %arg2[%c0_3, %c0_4, %c0_5, %c0_6] : memref<2x4x4x128xf32, #tpu.memory_space<vmem>>, vector<2x4x4x128xf32>
    %2 = vector.extract_strided_slice %0 {offsets = [0, 0, 0, 0], sizes = [1, 2, 4, 128], strides = [1, 1, 1, 1]} : vector<2x2x4x128xf32> to vector<1x2x4x128xf32>
    %3 = vector.shape_cast %2 : vector<1x2x4x128xf32> to vector<2x4x128xf32>
    %4 = vector.extract_strided_slice %0 {offsets = [1, 0, 0, 0], sizes = [1, 2, 4, 128], strides = [1, 1, 1, 1]} : vector<2x2x4x128xf32> to vector<1x2x4x128xf32>
    %5 = vector.shape_cast %4 : vector<1x2x4x128xf32> to vector<2x4x128xf32>
    %6 = vector.extract_strided_slice %1 {offsets = [0, 0, 0, 0], sizes = [1, 4, 4, 128], strides = [1, 1, 1, 1]} : vector<2x4x4x128xf32> to vector<1x4x4x128xf32>
    %7 = vector.shape_cast %6 : vector<1x4x4x128xf32> to vector<4x4x128xf32>
    %8 = vector.extract_strided_slice %1 {offsets = [1, 0, 0, 0], sizes = [1, 4, 4, 128], strides = [1, 1, 1, 1]} : vector<2x4x4x128xf32> to vector<1x4x4x128xf32>
    %9 = vector.shape_cast %8 : vector<1x4x4x128xf32> to vector<4x4x128xf32>
    %10 = vector.extract_strided_slice %3 {offsets = [0, 0, 0], sizes = [2, 1, 128], strides = [1, 1, 1]} : vector<2x4x128xf32> to vector<2x1x128xf32>
    %11 = vector.extract_strided_slice %5 {offsets = [0, 0, 0], sizes = [2, 1, 128], strides = [1, 1, 1]} : vector<2x4x128xf32> to vector<2x1x128xf32>
    %12 = vector.extract_strided_slice %7 {offsets = [0, 0, 0], sizes = [1, 4, 128], strides = [1, 1, 1]} : vector<4x4x128xf32> to vector<1x4x128xf32>
    %13 = vector.shape_cast %12 : vector<1x4x128xf32> to vector<4x128xf32>
    %14 = vector.shape_cast %13 : vector<4x128xf32> to vector<1x4x128xf32>
    %15 = vector.extract_strided_slice %9 {offsets = [0, 0, 0], sizes = [1, 4, 128], strides = [1, 1, 1]} : vector<4x4x128xf32> to vector<1x4x128xf32>
    %16 = vector.shape_cast %15 : vector<1x4x128xf32> to vector<4x128xf32>
    %17 = vector.shape_cast %16 : vector<4x128xf32> to vector<1x4x128xf32>
    %18 = vector.broadcast %10 : vector<2x1x128xf32> to vector<2x4x128xf32>
    %19 = vector.broadcast %14 : vector<1x4x128xf32> to vector<2x4x128xf32>
    %20 = arith.mulf %18, %19 : vector<2x4x128xf32>
    %21 = vector.broadcast %11 : vector<2x1x128xf32> to vector<2x4x128xf32>
    %22 = vector.broadcast %17 : vector<1x4x128xf32> to vector<2x4x128xf32>
    %23 = arith.mulf %21, %22 : vector<2x4x128xf32>
    %24 = arith.subf %20, %23 : vector<2x4x128xf32>
    %25 = vector.broadcast %10 : vector<2x1x128xf32> to vector<2x4x128xf32>
    %26 = vector.broadcast %17 : vector<1x4x128xf32> to vector<2x4x128xf32>
    %27 = arith.mulf %25, %26 : vector<2x4x128xf32>
    %28 = vector.broadcast %11 : vector<2x1x128xf32> to vector<2x4x128xf32>
    %29 = vector.broadcast %14 : vector<1x4x128xf32> to vector<2x4x128xf32>
    %30 = arith.mulf %28, %29 : vector<2x4x128xf32>
    %31 = arith.addf %27, %30 : vector<2x4x128xf32>
    %32 = vector.extract_strided_slice %3 {offsets = [0, 1, 0], sizes = [2, 1, 128], strides = [1, 1, 1]} : vector<2x4x128xf32> to vector<2x1x128xf32>
    %33 = vector.extract_strided_slice %5 {offsets = [0, 1, 0], sizes = [2, 1, 128], strides = [1, 1, 1]} : vector<2x4x128xf32> to vector<2x1x128xf32>
    %34 = vector.extract_strided_slice %7 {offsets = [1, 0, 0], sizes = [1, 4, 128], strides = [1, 1, 1]} : vector<4x4x128xf32> to vector<1x4x128xf32>
    %35 = vector.shape_cast %34 : vector<1x4x128xf32> to vector<4x128xf32>
    %36 = vector.shape_cast %35 : vector<4x128xf32> to vector<1x4x128xf32>
    %37 = vector.extract_strided_slice %9 {offsets = [1, 0, 0], sizes = [1, 4, 128], strides = [1, 1, 1]} : vector<4x4x128xf32> to vector<1x4x128xf32>
    %38 = vector.shape_cast %37 : vector<1x4x128xf32> to vector<4x128xf32>
    %39 = vector.shape_cast %38 : vector<4x128xf32> to vector<1x4x128xf32>
    %40 = vector.broadcast %32 : vector<2x1x128xf32> to vector<2x4x128xf32>
    %41 = vector.broadcast %36 : vector<1x4x128xf32> to vector<2x4x128xf32>
    %42 = arith.mulf %40, %41 : vector<2x4x128xf32>
    %43 = vector.broadcast %33 : vector<2x1x128xf32> to vector<2x4x128xf32>
    %44 = vector.broadcast %39 : vector<1x4x128xf32> to vector<2x4x128xf32>
    %45 = arith.mulf %43, %44 : vector<2x4x128xf32>
    %46 = arith.subf %42, %45 : vector<2x4x128xf32>
    %47 = vector.broadcast %32 : vector<2x1x128xf32> to vector<2x4x128xf32>
    %48 = vector.broadcast %39 : vector<1x4x128xf32> to vector<2x4x128xf32>
    %49 = arith.mulf %47, %48 : vector<2x4x128xf32>
    %50 = vector.broadcast %33 : vector<2x1x128xf32> to vector<2x4x128xf32>
    %51 = vector.broadcast %36 : vector<1x4x128xf32> to vector<2x4x128xf32>
    %52 = arith.mulf %50, %51 : vector<2x4x128xf32>
    %53 = arith.addf %49, %52 : vector<2x4x128xf32>
    %54 = arith.addf %24, %46 : vector<2x4x128xf32>
    %55 = arith.addf %31, %53 : vector<2x4x128xf32>
    %56 = vector.extract_strided_slice %3 {offsets = [0, 2, 0], sizes = [2, 1, 128], strides = [1, 1, 1]} : vector<2x4x128xf32> to vector<2x1x128xf32>
    %57 = vector.extract_strided_slice %5 {offsets = [0, 2, 0], sizes = [2, 1, 128], strides = [1, 1, 1]} : vector<2x4x128xf32> to vector<2x1x128xf32>
    %58 = vector.extract_strided_slice %7 {offsets = [2, 0, 0], sizes = [1, 4, 128], strides = [1, 1, 1]} : vector<4x4x128xf32> to vector<1x4x128xf32>
    %59 = vector.shape_cast %58 : vector<1x4x128xf32> to vector<4x128xf32>
    %60 = vector.shape_cast %59 : vector<4x128xf32> to vector<1x4x128xf32>
    %61 = vector.extract_strided_slice %9 {offsets = [2, 0, 0], sizes = [1, 4, 128], strides = [1, 1, 1]} : vector<4x4x128xf32> to vector<1x4x128xf32>
    %62 = vector.shape_cast %61 : vector<1x4x128xf32> to vector<4x128xf32>
    %63 = vector.shape_cast %62 : vector<4x128xf32> to vector<1x4x128xf32>
    %64 = vector.broadcast %56 : vector<2x1x128xf32> to vector<2x4x128xf32>
    %65 = vector.broadcast %60 : vector<1x4x128xf32> to vector<2x4x128xf32>
    %66 = arith.mulf %64, %65 : vector<2x4x128xf32>
    %67 = vector.broadcast %57 : vector<2x1x128xf32> to vector<2x4x128xf32>
    %68 = vector.broadcast %63 : vector<1x4x128xf32> to vector<2x4x128xf32>
    %69 = arith.mulf %67, %68 : vector<2x4x128xf32>
    %70 = arith.subf %66, %69 : vector<2x4x128xf32>
    %71 = vector.broadcast %56 : vector<2x1x128xf32> to vector<2x4x128xf32>
    %72 = vector.broadcast %63 : vector<1x4x128xf32> to vector<2x4x128xf32>
    %73 = arith.mulf %71, %72 : vector<2x4x128xf32>
    %74 = vector.broadcast %57 : vector<2x1x128xf32> to vector<2x4x128xf32>
    %75 = vector.broadcast %60 : vector<1x4x128xf32> to vector<2x4x128xf32>
    %76 = arith.mulf %74, %75 : vector<2x4x128xf32>
    %77 = arith.addf %73, %76 : vector<2x4x128xf32>
    %78 = arith.addf %54, %70 : vector<2x4x128xf32>
    %79 = arith.addf %55, %77 : vector<2x4x128xf32>
    %80 = vector.extract_strided_slice %3 {offsets = [0, 3, 0], sizes = [2, 1, 128], strides = [1, 1, 1]} : vector<2x4x128xf32> to vector<2x1x128xf32>
    %81 = vector.extract_strided_slice %5 {offsets = [0, 3, 0], sizes = [2, 1, 128], strides = [1, 1, 1]} : vector<2x4x128xf32> to vector<2x1x128xf32>
    %82 = vector.extract_strided_slice %7 {offsets = [3, 0, 0], sizes = [1, 4, 128], strides = [1, 1, 1]} : vector<4x4x128xf32> to vector<1x4x128xf32>
    %83 = vector.shape_cast %82 : vector<1x4x128xf32> to vector<4x128xf32>
    %84 = vector.shape_cast %83 : vector<4x128xf32> to vector<1x4x128xf32>
    %85 = vector.extract_strided_slice %9 {offsets = [3, 0, 0], sizes = [1, 4, 128], strides = [1, 1, 1]} : vector<4x4x128xf32> to vector<1x4x128xf32>
    %86 = vector.shape_cast %85 : vector<1x4x128xf32> to vector<4x128xf32>
    %87 = vector.shape_cast %86 : vector<4x128xf32> to vector<1x4x128xf32>
    %88 = vector.broadcast %80 : vector<2x1x128xf32> to vector<2x4x128xf32>
    %89 = vector.broadcast %84 : vector<1x4x128xf32> to vector<2x4x128xf32>
    %90 = arith.mulf %88, %89 : vector<2x4x128xf32>
    %91 = vector.broadcast %81 : vector<2x1x128xf32> to vector<2x4x128xf32>
    %92 = vector.broadcast %87 : vector<1x4x128xf32> to vector<2x4x128xf32>
    %93 = arith.mulf %91, %92 : vector<2x4x128xf32>
    %94 = arith.subf %90, %93 : vector<2x4x128xf32>
    %95 = vector.broadcast %80 : vector<2x1x128xf32> to vector<2x4x128xf32>
    %96 = vector.broadcast %87 : vector<1x4x128xf32> to vector<2x4x128xf32>
    %97 = arith.mulf %95, %96 : vector<2x4x128xf32>
    %98 = vector.broadcast %81 : vector<2x1x128xf32> to vector<2x4x128xf32>
    %99 = vector.broadcast %84 : vector<1x4x128xf32> to vector<2x4x128xf32>
    %100 = arith.mulf %98, %99 : vector<2x4x128xf32>
    %101 = arith.addf %97, %100 : vector<2x4x128xf32>
    %102 = arith.addf %78, %94 : vector<2x4x128xf32>
    %103 = arith.addf %79, %101 : vector<2x4x128xf32>
    %c0_7 = arith.constant 0 : index
    %c0_8 = arith.constant 0 : index
    %c0_9 = arith.constant 0 : index
    %c0_10 = arith.constant 0 : index
    %104 = vector.load %arg3[%c0_7, %c0_8, %c0_9, %c0_10] : memref<2x2x4x128xf32, #tpu.memory_space<vmem>>, vector<1x2x4x128xf32>
    %105 = vector.shape_cast %104 : vector<1x2x4x128xf32> to vector<2x4x128xf32>
    %106 = vector.shape_cast %102 : vector<2x4x128xf32> to vector<1x2x4x128xf32>
    tpu.vector_store %arg3[%c0_7, %c0_8, %c0_9, %c0_10], %106 {strides = array<i32>} : memref<2x2x4x128xf32, #tpu.memory_space<vmem>>, vector<1x2x4x128xf32>,
    %c1 = arith.constant 1 : index
    %c0_11 = arith.constant 0 : index
    %c0_12 = arith.constant 0 : index
    %c0_13 = arith.constant 0 : index
    %107 = vector.load %arg3[%c1, %c0_11, %c0_12, %c0_13] : memref<2x2x4x128xf32, #tpu.memory_space<vmem>>, vector<1x2x4x128xf32>
    %108 = vector.shape_cast %107 : vector<1x2x4x128xf32> to vector<2x4x128xf32>
    %109 = vector.shape_cast %103 : vector<2x4x128xf32> to vector<1x2x4x128xf32>
    tpu.vector_store %arg3[%c1, %c0_11, %c0_12, %c0_13], %109 {strides = array<i32>} : memref<2x2x4x128xf32, #tpu.memory_space<vmem>>, vector<1x2x4x128xf32>,
    return
  }
  func.func @transform_0(%arg0: i32) -> (i32, i32, i32, i32) {
    %c0_i32 = arith.constant 0 : i32
    %c0_i32_0 = arith.constant 0 : i32
    %c0_i32_1 = arith.constant 0 : i32
    %c0_i32_2 = arith.constant 0 : i32
    return %c0_i32, %c0_i32_0, %c0_i32_1, %arg0 : i32, i32, i32, i32
  }
  func.func @transform_1(%arg0: i32) -> (i32, i32, i32, i32) {
    %c0_i32 = arith.constant 0 : i32
    %c0_i32_0 = arith.constant 0 : i32
    %c0_i32_1 = arith.constant 0 : i32
    %c0_i32_2 = arith.constant 0 : i32
    return %c0_i32, %c0_i32_0, %c0_i32_1, %arg0 : i32, i32, i32, i32
  }
  func.func @transform_2(%arg0: i32) -> (i32, i32, i32, i32) {
    %c0_i32 = arith.constant 0 : i32
    %c0_i32_0 = arith.constant 0 : i32
    %c0_i32_1 = arith.constant 0 : i32
    %c0_i32_2 = arith.constant 0 : i32
    return %c0_i32, %c0_i32_0, %c0_i32_1, %arg0 : i32, i32, i32, i32
  }
}

</mosaic_0001>

<llo_original>
// kernel: tpu_custom_call.1
$region0: #{tpu_custom_call.1}
  #allocation0 [shape = 'u32[]', space=smem, size = 0x4, offset = 0x4, fixed_abs, tag = 'smem constant byte address 0x4 - core index']
  #allocation1 [shape = 'u32[144,128]{1,0:T(1,128)}', space=vmem, size = 0x12000, scoped, tag = 'internal scratch']
  %s0 = inlined_call_operand.hbm [shape: f32[2,2,4,128], index: 0, kind: input, shape index: {}]
  %s1 = inlined_call_operand.hbm [shape: f32[2,4,4,128], index: 1, kind: input, shape index: {}]
  %s2 = inlined_call_operand.hbm [shape: f32[2,2,4,128], index: 2, kind: output, shape index: {}]
  %s3 = sld [smem:[#allocation0]]
  $region26: #{tpu_custom_call.1} parent=0
    _
  %s5 = ssub.s32 1, %s3
  %s6 = scalar_select 0, %s5, %s3
  $region1: #{tpu_custom_call.1} parent=0
    #allocation2 [shape = 'u8[8192]{0}', space=vmem, size = 0x2000, scoped, tag = 'input window, operand 0, single buffered']
    #allocation3 [shape = 's32[1]{0}', space=sflag, size = 0x4, scoped, tag = 'scoped memory for tpu_custom_call.1']
    #allocation4 [shape = 's32[1]{0}', space=sflag, size = 0x4, scoped, tag = 'scoped memory for tpu_custom_call.1']
    #allocation5 [shape = 'u8[16384]{0}', space=vmem, size = 0x4000, scoped, tag = 'input window, operand 1, single buffered']
    #allocation6 [shape = 's32[1]{0}', space=sflag, size = 0x4, scoped, tag = 'scoped memory for tpu_custom_call.1']
    #allocation7 [shape = 'u8[8192]{0}', space=vmem, size = 0x2000, scoped, tag = 'output window, operand 0, single buffered']
    %7 = vsyncpa [#allocation3], 0
    %8 = vsyncpa [#allocation6], 0
    %9 = vsyncpa [#allocation4], 0
    // Predicated region
    $region2: #{tpu_custom_call.1} parent=1 // pred_check
      _
    $region3: #{tpu_custom_call.1} parent=1 // pred_check_branch
      %11 = sbr.rel (0) target = $region5
    $region4: #{tpu_custom_call.1} parent=1 // pred_region
      %s13 = ssub.s32 256, 256
      %14 = vsyncadd [#allocation3], %s13
      %s15 = sshll.u32 [#allocation2], 4
      %s16 = int_to_ptr.vmem [resolvable:$true] %s15
      %21 = dma.hbm_to_vmem [thread:$0]  %s0, 256, %s16, [#allocation3], 64, 64, 4
    $region5: #{tpu_custom_call.1} parent=1 // pred_fallthru
      _
    // Predicated region
    $region6: #{tpu_custom_call.1} parent=1 // pred_check
      _
    $region7: #{tpu_custom_call.1} parent=1 // pred_check_branch
      %23 = sbr.rel (0) target = $region9
    $region8: #{tpu_custom_call.1} parent=1 // pred_region
      %s25 = ssub.s32 512, 512
      %26 = vsyncadd [#allocation6], %s25
      %s27 = sshll.u32 [#allocation5], 4
      %s28 = int_to_ptr.vmem [resolvable:$true] %s27
      %33 = dma.hbm_to_vmem [thread:$0]  %s1, 512, %s28, [#allocation6], 64, 64, 4
    $region9: #{tpu_custom_call.1} parent=1 // pred_fallthru
      _
    // Predicated region
    $region10: #{tpu_custom_call.1} parent=1 // pred_check
      _
    $region11: #{tpu_custom_call.1} parent=1 // pred_check_branch
      %35 = sbr.rel (0) target = $region13
    $region12: #{tpu_custom_call.1} parent=1 // pred_region
      %36 = dma.done [#allocation3], 256
    $region13: #{tpu_custom_call.1} parent=1 // pred_fallthru
      _
    // Predicated region
    $region14: #{tpu_custom_call.1} parent=1 // pred_check
      _
    $region15: #{tpu_custom_call.1} parent=1 // pred_check_branch
      %38 = sbr.rel (0) target = $region17
    $region16: #{tpu_custom_call.1} parent=1 // pred_region
      %39 = dma.done [#allocation6], 512
    $region17: #{tpu_custom_call.1} parent=1 // pred_fallthru
      _
    %v40 = vld [vmem:[#allocation2] sm:$0xf]
    %v41 = vld [vmem:[#allocation2 + $0x4] sm:$0xf]
    %v42 = vld [vmem:[#allocation2 + $0x8] sm:$0xf]
    %v43 = vld [vmem:[#allocation2 + $0xc] sm:$0xf]
    %v44 = vld [vmem:[#allocation5] sm:$0xf]
    %v45 = vld [vmem:[#allocation5 + $0x4] sm:$0xf]
    %v46 = vld [vmem:[#allocation5 + $0x8] sm:$0xf]
    %v47 = vld [vmem:[#allocation5 + $0xc] sm:$0xf]
    %v48 = vld [vmem:[#allocation5 + $0x10] sm:$0xf]
    %v49 = vld [vmem:[#allocation5 + $0x14] sm:$0xf]
    %v50 = vld [vmem:[#allocation5 + $0x18] sm:$0xf]
    %v51 = vld [vmem:[#allocation5 + $0x1c] sm:$0xf]
    %v52 = vlaneseq
    %v53 = vshrl.u32 %v52, 7
    %v54 = vsub.s32 0, %v53
    %v55 = vrot.slane %v40, %v54
    %v56 = vlaneseq
    %v57 = vshrl.u32 %v56, 7
    %v58 = vsub.s32 0, %v57
    %v59 = vrot.slane %v41, %v58
    %v60 = vmul.f32 %v55, %v44
    %v61 = vmul.f32 %v59, %v44
    %v62 = vlaneseq
    %v63 = vshrl.u32 %v62, 7
    %v64 = vsub.s32 0, %v63
    %v65 = vrot.slane %v42, %v64
    %v66 = vlaneseq
    %v67 = vshrl.u32 %v66, 7
    %v68 = vsub.s32 0, %v67
    %v69 = vrot.slane %v43, %v68
    %v70 = vmul.f32 %v65, %v48
    %v71 = vmul.f32 %v69, %v48
    %v72 = vsub.f32 %v60, %v70
    %v73 = vsub.f32 %v61, %v71
    %v74 = vmul.f32 %v55, %v48
    %v75 = vmul.f32 %v59, %v48
    %v76 = vmul.f32 %v65, %v44
    %v77 = vmul.f32 %v69, %v44
    %v78 = vadd.f32 %v74, %v76
    %v79 = vadd.f32 %v75, %v77
    %v80 = vlaneseq
    %v81 = vshrl.u32 %v80, 7
    %v82 = vsub.s32 1, %v81
    %v83 = vrot.slane %v40, %v82
    %v84 = vlaneseq
    %v85 = vshrl.u32 %v84, 7
    %v86 = vsub.s32 1, %v85
    %v87 = vrot.slane %v41, %v86
    %v88 = vmul.f32 %v83, %v45
    %v89 = vmul.f32 %v87, %v45
    %v90 = vlaneseq
    %v91 = vshrl.u32 %v90, 7
    %v92 = vsub.s32 1, %v91
    %v93 = vrot.slane %v42, %v92
    %v94 = vlaneseq
    %v95 = vshrl.u32 %v94, 7
    %v96 = vsub.s32 1, %v95
    %v97 = vrot.slane %v43, %v96
    %v98 = vmul.f32 %v93, %v49
    %v99 = vmul.f32 %v97, %v49
    %v100 = vsub.f32 %v88, %v98
    %v101 = vsub.f32 %v89, %v99
    %v102 = vmul.f32 %v83, %v49
    %v103 = vmul.f32 %v87, %v49
    %v104 = vmul.f32 %v93, %v45
    %v105 = vmul.f32 %v97, %v45
    %v106 = vadd.f32 %v102, %v104
    %v107 = vadd.f32 %v103, %v105
    %v108 = vadd.f32 %v72, %v100
    %v109 = vadd.f32 %v73, %v101
    %v110 = vadd.f32 %v78, %v106
    %v111 = vadd.f32 %v79, %v107
    %v112 = vlaneseq
    %v113 = vshrl.u32 %v112, 7
    %v114 = vsub.s32 2, %v113
    %v115 = vrot.slane %v40, %v114
    %v116 = vlaneseq
    %v117 = vshrl.u32 %v116, 7
    %v118 = vsub.s32 2, %v117
    %v119 = vrot.slane %v41, %v118
    %v120 = vmul.f32 %v115, %v46
    %v121 = vmul.f32 %v119, %v46
    %v122 = vlaneseq
    %v123 = vshrl.u32 %v122, 7
    %v124 = vsub.s32 2, %v123
    %v125 = vrot.slane %v42, %v124
    %v126 = vlaneseq
    %v127 = vshrl.u32 %v126, 7
    %v128 = vsub.s32 2, %v127
    %v129 = vrot.slane %v43, %v128
    %v130 = vmul.f32 %v125, %v50
    %v131 = vmul.f32 %v129, %v50
    %v132 = vsub.f32 %v120, %v130
    %v133 = vsub.f32 %v121, %v131
    %v134 = vmul.f32 %v115, %v50
    %v135 = vmul.f32 %v119, %v50
    %v136 = vmul.f32 %v125, %v46
    %v137 = vmul.f32 %v129, %v46
    %v138 = vadd.f32 %v134, %v136
    %v139 = vadd.f32 %v135, %v137
    %v140 = vadd.f32 %v108, %v132
    %v141 = vadd.f32 %v109, %v133
    %v142 = vadd.f32 %v110, %v138
    %v143 = vadd.f32 %v111, %v139
    %v144 = vlaneseq
    %v145 = vshrl.u32 %v144, 7
    %v146 = vsub.s32 3, %v145
    %v147 = vrot.slane %v40, %v146
    %v148 = vlaneseq
    %v149 = vshrl.u32 %v148, 7
    %v150 = vsub.s32 3, %v149
    %v151 = vrot.slane %v41, %v150
    %v152 = vmul.f32 %v147, %v47
    %v153 = vmul.f32 %v151, %v47
    %v154 = vlaneseq
    %v155 = vshrl.u32 %v154, 7
    %v156 = vsub.s32 3, %v155
    %v157 = vrot.slane %v42, %v156
    %v158 = vlaneseq
    %v159 = vshrl.u32 %v158, 7
    %v160 = vsub.s32 3, %v159
    %v161 = vrot.slane %v43, %v160
    %v162 = vmul.f32 %v157, %v51
    %v163 = vmul.f32 %v161, %v51
    %v164 = vsub.f32 %v152, %v162
    %v165 = vsub.f32 %v153, %v163
    %v166 = vmul.f32 %v147, %v51
    %v167 = vmul.f32 %v151, %v51
    %v168 = vmul.f32 %v157, %v47
    %v169 = vmul.f32 %v161, %v47
    %v170 = vadd.f32 %v166, %v168
    %v171 = vadd.f32 %v167, %v169
    %v172 = vadd.f32 %v140, %v164
    %v173 = vadd.f32 %v141, %v165
    %v174 = vadd.f32 %v142, %v170
    %v175 = vadd.f32 %v143, %v171
    %176 = vst [vmem:[#allocation7] sm:$0xf] %v172
    %177 = vst [vmem:[#allocation7 + $0x4] sm:$0xf] %v173
    %s178 = scalar_lea.vmem [#allocation7], 8
    %179 = vst [vmem:[%s178] sm:$0xf] %v174
    %180 = vst [vmem:[%s178 + $0x4] sm:$0xf] %v175
    // Predicated region
    $region18: #{tpu_custom_call.1} parent=1 // pred_check
      _
    $region19: #{tpu_custom_call.1} parent=1 // pred_check_branch
      %182 = sbr.rel (0) target = $region21
    $region20: #{tpu_custom_call.1} parent=1 // pred_region
      %s184 = ssub.s32 256, 256
      %185 = vsyncadd [#allocation4], %s184
      %s186 = sshll.u32 [#allocation7], 4
      %s187 = int_to_ptr.vmem [resolvable:$true] %s186
      %192 = dma.vmem_to_hbm [thread:$0]  %s187, 256, %s2, [#allocation4], 64, 64, 4
    $region21: #{tpu_custom_call.1} parent=1 // pred_fallthru
      _
    // Predicated region
    $region22: #{tpu_custom_call.1} parent=1 // pred_check
      _
    $region23: #{tpu_custom_call.1} parent=1 // pred_check_branch
      %194 = sbr.rel (0) target = $region25
    $region24: #{tpu_custom_call.1} parent=1 // pred_region
      %195 = dma.done [#allocation4], 256
    $region25: #{tpu_custom_call.1} parent=1 // pred_fallthru
      _
    %196 = vsyncpa [#allocation3], 1
    %197 = vsyncpa [#allocation6], 1
    %198 = vsyncpa [#allocation4], 1

</llo_original>
